<compile_context>
chip_gen: v5e
topology: v5e:2x2
jax: 0.10.0
libtpu: 0.0.40
codegen_flags: <defaults>
</compile_context>

<pallas_src>
import jax
import jax.numpy as jnp
from jax.experimental import pallas as pl
from jax.experimental.pallas import tpu as pltpu


def _make_hbm_copy_kernel(n_chunks: int, rows_per_chunk: int, n_rows: int):
    """Kernel factory: HBM->HBM DMA copy of an (n_rows, F) buffer in
    `n_chunks` row-contiguous chunks, all copies outstanding simultaneously.

    All chunk offsets/sizes are static Python ints (resolved at trace time),
    so the body lowers to a handful of DMA descriptors + waits.
    """

    def kernel(x_hbm, o_hbm, sems):
        copies = []
        for c in range(n_chunks):
            start = c * rows_per_chunk
            rows = min(rows_per_chunk, n_rows - start)
            cp = pltpu.make_async_copy(
                x_hbm.at[pl.ds(start, rows)],
                o_hbm.at[pl.ds(start, rows)],
                sems.at[c],
            )
            cp.start()          # issue; keep all chunks in flight
            copies.append(cp)
        for cp in copies:       # then drain
            cp.wait()

    return kernel


def flatten(x: jax.Array) -> jax.Array:
    """Pallas equivalent of Flatten.forward: (N, ...) -> (N, prod(...))."""
    n = x.shape[0]
    f = 1
    for d in x.shape[1:]:
        f *= d

    # Row-major collapse is metadata-only; the kernel only ever sees the
    # contiguous 2-D (N, F) buffer.
    x2 = x.reshape(n, f)

    if n == 0 or f == 0:
        return x2  # nothing to copy

    # 2-4 outstanding DMAs: enough to hide per-copy issue latency while each
    # chunk remains one large contiguous transfer at the HBM roofline.
    n_chunks = min(4, n)
    rows_per_chunk = pl.cdiv(n, n_chunks)
    n_chunks = pl.cdiv(n, rows_per_chunk)  # re-derive: last chunk non-empty

    kernel = _make_hbm_copy_kernel(n_chunks, rows_per_chunk, n)

    return pl.pallas_call(
        kernel,
        out_shape=jax.ShapeDtypeStruct((n, f), x.dtype),
        # No auto-DMA / no VMEM staging: kernel gets raw HBM refs.
        in_specs=[pl.BlockSpec(memory_space=pl.ANY)],
        out_specs=pl.BlockSpec(memory_space=pl.ANY),
        scratch_shapes=[pltpu.SemaphoreType.DMA((n_chunks,))],
    )(x2)


if __name__ == "__main__":
    key = jax.random.PRNGKey(0)
    # Small NCHW input consistent with a conv-feature-map flatten.
    N, C, H, W = 2, 4, 16, 16
    x = jax.random.normal(key, (N, C, H, W), dtype=jnp.float32)

    out = jax.block_until_ready(flatten(x))

    # Correctness check against plain JAX reshape (== torch .view semantics).
    ref = x.reshape(N, -1)
    assert out.shape == (N, C * H * W), out.shape
    assert out.dtype == x.dtype
    assert bool(jnp.array_equal(out, ref))

    print("KERNEL_OK")
</pallas_src>

<mosaic_0001>
module attributes {stable_mosaic.version = 11 : i64} {
  func.func @kernel(%arg0: memref<2x1024xf32, #tpu.memory_space<any>>, %arg1: memref<2x1024xf32, #tpu.memory_space<any>>, %arg2: memref<2x!tpu.dma_semaphore, #tpu.memory_space<semaphore_mem>>) attributes {dimension_semantics = [], scalar_prefetch = 0 : i64, scratch_operands = 1 : i64, tpu.core_type = #tpu.core_type<tc>} {
    %c0_i32 = arith.constant 0 : i32
    %c0_i32_0 = arith.constant 0 : i32
    %c0_i32_1 = arith.constant 0 : i32
    %0 = tpu.memref_slice %arg0[%c0_i32_0, %c0_i32_1] : memref<2x1024xf32, #tpu.memory_space<any>> -> memref<1x1024xf32, #tpu.memory_space<any>>
    %c0_i32_2 = arith.constant 0 : i32
    %c0_i32_3 = arith.constant 0 : i32
    %1 = tpu.memref_slice %arg1[%c0_i32_2, %c0_i32_3] : memref<2x1024xf32, #tpu.memory_space<any>> -> memref<1x1024xf32, #tpu.memory_space<any>>
    %2 = tpu.memref_slice %arg2[%c0_i32] : memref<2x!tpu.dma_semaphore, #tpu.memory_space<semaphore_mem>> -> memref<1x!tpu.dma_semaphore, #tpu.memory_space<semaphore_mem>>
    %3 = tpu.memref_squeeze %2 : memref<1x!tpu.dma_semaphore, #tpu.memory_space<semaphore_mem>> -> memref<!tpu.dma_semaphore, #tpu.memory_space<semaphore_mem>>
    tpu.enqueue_dma source(%0 : memref<1x1024xf32, #tpu.memory_space<any>>) target(%1 : memref<1x1024xf32, #tpu.memory_space<any>>) target_semaphore(%3 : memref<!tpu.dma_semaphore, #tpu.memory_space<semaphore_mem>>)
    %c1_i32 = arith.constant 1 : i32
    %c1_i32_4 = arith.constant 1 : i32
    %c0_i32_5 = arith.constant 0 : i32
    %4 = tpu.memref_slice %arg0[%c1_i32_4, %c0_i32_5] : memref<2x1024xf32, #tpu.memory_space<any>> -> memref<1x1024xf32, #tpu.memory_space<any>>
    %c1_i32_6 = arith.constant 1 : i32
    %c0_i32_7 = arith.constant 0 : i32
    %5 = tpu.memref_slice %arg1[%c1_i32_6, %c0_i32_7] : memref<2x1024xf32, #tpu.memory_space<any>> -> memref<1x1024xf32, #tpu.memory_space<any>>
    %6 = tpu.memref_slice %arg2[%c1_i32] : memref<2x!tpu.dma_semaphore, #tpu.memory_space<semaphore_mem>> -> memref<1x!tpu.dma_semaphore, #tpu.memory_space<semaphore_mem>>
    %7 = tpu.memref_squeeze %6 : memref<1x!tpu.dma_semaphore, #tpu.memory_space<semaphore_mem>> -> memref<!tpu.dma_semaphore, #tpu.memory_space<semaphore_mem>>
    tpu.enqueue_dma source(%4 : memref<1x1024xf32, #tpu.memory_space<any>>) target(%5 : memref<1x1024xf32, #tpu.memory_space<any>>) target_semaphore(%7 : memref<!tpu.dma_semaphore, #tpu.memory_space<semaphore_mem>>)
    %c0_i32_8 = arith.constant 0 : i32
    %c0_i32_9 = arith.constant 0 : i32
    %c0_i32_10 = arith.constant 0 : i32
    %8 = tpu.memref_slice %arg0[%c0_i32_9, %c0_i32_10] : memref<2x1024xf32, #tpu.memory_space<any>> -> memref<1x1024xf32, #tpu.memory_space<any>>
    %c0_i32_11 = arith.constant 0 : i32
    %c0_i32_12 = arith.constant 0 : i32
    %9 = tpu.memref_slice %arg1[%c0_i32_11, %c0_i32_12] : memref<2x1024xf32, #tpu.memory_space<any>> -> memref<1x1024xf32, #tpu.memory_space<any>>
    %10 = tpu.memref_slice %arg2[%c0_i32_8] : memref<2x!tpu.dma_semaphore, #tpu.memory_space<semaphore_mem>> -> memref<1x!tpu.dma_semaphore, #tpu.memory_space<semaphore_mem>>
    %11 = tpu.memref_squeeze %10 : memref<1x!tpu.dma_semaphore, #tpu.memory_space<semaphore_mem>> -> memref<!tpu.dma_semaphore, #tpu.memory_space<semaphore_mem>>
    tpu.wait_dma2 semaphore(%11 : memref<!tpu.dma_semaphore, #tpu.memory_space<semaphore_mem>>) src(%8 : memref<1x1024xf32, #tpu.memory_space<any>>) dst(%9 : memref<1x1024xf32, #tpu.memory_space<any>>)
    %c1_i32_13 = arith.constant 1 : i32
    %c1_i32_14 = arith.constant 1 : i32
    %c0_i32_15 = arith.constant 0 : i32
    %12 = tpu.memref_slice %arg0[%c1_i32_14, %c0_i32_15] : memref<2x1024xf32, #tpu.memory_space<any>> -> memref<1x1024xf32, #tpu.memory_space<any>>
    %c1_i32_16 = arith.constant 1 : i32
    %c0_i32_17 = arith.constant 0 : i32
    %13 = tpu.memref_slice %arg1[%c1_i32_16, %c0_i32_17] : memref<2x1024xf32, #tpu.memory_space<any>> -> memref<1x1024xf32, #tpu.memory_space<any>>
    %14 = tpu.memref_slice %arg2[%c1_i32_13] : memref<2x!tpu.dma_semaphore, #tpu.memory_space<semaphore_mem>> -> memref<1x!tpu.dma_semaphore, #tpu.memory_space<semaphore_mem>>
    %15 = tpu.memref_squeeze %14 : memref<1x!tpu.dma_semaphore, #tpu.memory_space<semaphore_mem>> -> memref<!tpu.dma_semaphore, #tpu.memory_space<semaphore_mem>>
    tpu.wait_dma2 semaphore(%15 : memref<!tpu.dma_semaphore, #tpu.memory_space<semaphore_mem>>) src(%12 : memref<1x1024xf32, #tpu.memory_space<any>>) dst(%13 : memref<1x1024xf32, #tpu.memory_space<any>>)
    return
  }
}

</mosaic_0001>

<llo_original>
// kernel: tpu_custom_call.1
$region0: #{tpu_custom_call.1}
  #allocation0 [shape = 'u32[]', space=smem, size = 0x4, offset = 0x4, fixed_abs, tag = 'smem constant byte address 0x4 - core index']
  #allocation1 [shape = 'u32[72,128]{1,0:T(1,128)}', space=vmem, size = 0x9000, scoped, tag = 'internal scratch']
  #allocation2 [shape = 's32[2]{0}', space=sflag, size = 0x8, scoped, tag = 'scratch operand']
  #allocation3 [shape = 's32[]', space=sflag, size = 0x4, offset = 0, fixed_abs, tag = 'sflag constant byte address 0x0 - dummy sync flag']
  #allocation5 [shape = 's32[]', space=sflag, size = 0x4, offset = 0, fixed_abs, tag = 'sflag constant byte address 0x0 - dummy sync flag']
  %s0 = inlined_call_operand.hbm [shape: f32[2,1024], index: 0, kind: input, shape index: {}]
  %s1 = inlined_call_operand.hbm [shape: f32[2,1024], index: 1, kind: output, shape index: {}]
  %s2 = sld [smem:[#allocation0]]
  $region2: #{tpu_custom_call.1} parent=0
    _
  %s4 = ssub.s32 1, %s2
  %s5 = scalar_select 0, %s4, %s2
  $region1: #{tpu_custom_call.1} parent=0
    #allocation4 [shape = 'u32[3]{0}', space=smem, size = 0xc, scoped, tag = 'DMA stride descriptor']
    #allocation6 [shape = 'u32[3]{0}', space=smem, size = 0xc, scoped, tag = 'DMA stride descriptor']
    %s7 = sshll.u32 1, 14
    %s8 = sxor.u32 4294967295, %s7
    %s10 = sshll.u32 %s0, 4
    %s11 = int_to_ptr.hbm [resolvable:$true] %s10
    %s12 = sshll.u32 %s1, 4
    %s13 = int_to_ptr.hbm [resolvable:$true] %s12
    %17 = sst [smem:[#allocation4]] 32
    %s18 = scalar_lea.smem [#allocation4], 1
    %19 = sst [smem:[%s18]] 32
    %s20 = scalar_lea.smem [#allocation4], 2
    %21 = sst [smem:[%s20]] 1
    %23 = dma.general %s11, 128, %s13, [#allocation2], [#allocation3], [#allocation4], 0, 0
    %s24 = scalar_lea.hbm %s0, 1
    %s25 = scalar_lea.hbm %s1, 1
    %s26 = scalar_lea.sflag [#allocation2], 1
    %s28 = sshll.u32 1, 14
    %s29 = sxor.u32 4294967295, %s28
    %s31 = sshll.u32 %s24, 4
    %s32 = int_to_ptr.hbm [resolvable:$true] %s31
    %s33 = sshll.u32 %s25, 4
    %s34 = int_to_ptr.hbm [resolvable:$true] %s33
    %38 = sst [smem:[#allocation6]] 32
    %s39 = scalar_lea.smem [#allocation6], 1
    %40 = sst [smem:[%s39]] 32
    %s41 = scalar_lea.smem [#allocation6], 2
    %42 = sst [smem:[%s41]] 1
    %44 = dma.general %s32, 128, %s34, %s26, [#allocation5], [#allocation6], 0, 0
    %s45 = smul.u32 1, 8
    %s46 = sshll.u32 %s45, 4
    %47 = dma.done [#allocation2], %s46
    %s48 = sshll.u32 %s45, 4
    %49 = dma.done %s26, %s48
  %50 = vsyncmov [#allocation2]
  %s51 = vpop.sfrf %50
  %p52 = scmp.eq.s32.totalorder %s51, 0
  %p53 = pneg %p52
  %55 = shalt.err (%p53)
  %s56 = scalar_lea.sflag [#allocation2], 1
  %57 = vsyncmov %s56
  %s58 = vpop.sfrf %57
  %p59 = scmp.eq.s32.totalorder %s58, 0
  %p60 = pneg %p59
  %62 = shalt.err (%p60)

</llo_original>
